<compile_context>
chip_gen: v5e
topology: v5e:2x2
jax: 0.10.0
libtpu: 0.0.40
codegen_flags: <defaults>
</compile_context>

<pallas_src>
import functools

import jax
import jax.numpy as jnp
from jax.experimental import pallas as pl
from jax.experimental.pallas import tpu as pltpu


def _grouped_softmax(s, group, n_valid):
    """Per-sample softmax on lane-dense scores.

    s: (1, R) scores; every `group` consecutive lanes belong to one sample
    (group is a power of two, R is a multiple of group). Returns (1, R).
    The per-group max/sum use an in-group XOR butterfly: partner(lane) = lane ^ k
    never crosses a group boundary, so plain full-row rolls + selects suffice and
    no lane<->sublane reshape is needed.
    """
    lane = jax.lax.broadcasted_iota(jnp.int32, s.shape, dimension=1)
    member = lane % group
    if n_valid < group:  # member-axis padding (only when N is not a power of two)
        s = jnp.where(member < n_valid, s, -jnp.inf)

    # Grouped max.
    m = s
    k = 1
    while k < group:
        hi = jnp.roll(m, -k, axis=1)   # hi[i] = m[i + k]
        lo = jnp.roll(m, k, axis=1)    # lo[i] = m[i - k]
        m = jnp.maximum(m, jnp.where((lane & k) == 0, hi, lo))
        k *= 2

    e = jnp.exp(s - m)                 # padded members: exp(-inf - finite) == 0

    # Grouped sum (same butterfly; each element counted exactly once).
    d = e
    k = 1
    while k < group:
        hi = jnp.roll(d, -k, axis=1)
        lo = jnp.roll(d, k, axis=1)
        d = d + jnp.where((lane & k) == 0, hi, lo)
        k *= 2

    return e / d                       # exact normalization (no approx reciprocal)


def attention_layer_kernel(x_ref, p_ref, out_ref, *, group, n_valid):
    # x_ref:   (rows, D)   rows = Bt * group flattened samples (contiguous DMA)
    # p_ref:   (H, D+2)    packed params: [:, :D] = w1.T, [:, D] = b1, [:, D+1] = w2
    # out_ref: (1, rows)   lane-dense softmax weights, sample-major
    rows, d = x_ref.shape
    w1_t = p_ref[:, 0:d]               # (H, D) == w1.T
    b1 = p_ref[:, d:d + 1]             # (H, 1)
    w2 = p_ref[:, d + 1:d + 2]         # (H, 1)

    # Linear(D, 16) for the whole tile in ONE wide MXU matmul (trans_b form):
    # (H, D) x (rows, D)^T -> (H, rows); rows columns keep the MXU busy and the
    # result comes out lane-dense.
    h_t = jax.lax.dot_general(
        w1_t, x_ref[...], (((1,), (1,)), ((), ())),
        precision=jax.lax.Precision.HIGHEST,
        preferred_element_type=jnp.float32)                    # (H, rows)
    h_t = jnp.maximum(h_t + b1, 0.0)   # bias + ReLU; Dropout(0) is the identity.

    # Linear(16, 1) WITHOUT its bias (softmax(s + c) == softmax(s)):
    # VPU multiply + cheap sublane sum instead of a K=16, N=1 MXU op.
    s = jnp.sum(h_t * w2, axis=0, keepdims=True)               # (1, rows)

    out_ref[...] = _grouped_softmax(s, group, n_valid).astype(out_ref.dtype)


def pack_params(w1, b1, w2):
    """w1 (D, H), b1 (H,), w2 (H, 1) -> one resident (H, D+2) parameter buffer."""
    return jnp.concatenate([w1.T, b1.reshape(-1, 1), w2.reshape(-1, 1)], axis=1)


def attention_layer_batched(x, params, *, block_b=None):
    """x: (B, N, D) float32, params: (H, D+2)  ->  (B, 1, N) attention weights."""
    B, N, D = x.shape
    H = params.shape[0]

    # Pad the member axis to a power of two so the in-kernel group reduce is a
    # lane butterfly.  (N=8 in the demo -> no padding.)
    n_pad = max(int(pl.next_power_of_2(N)), 1)
    if n_pad != N:
        x = jnp.pad(x, ((0, 0), (0, n_pad - N), (0, 0)))

    # Samples per grid step: big tiles amortize the ~0.35us/step pipeline overhead
    # (VMEM is nowhere near a constraint even on v7x), but keep >= 2 grid steps
    # when B >= 2 so v7x's two TensorCores both get work.
    if block_b is None:
        block_b = min(B, 1024)
        if B >= 2:
            block_b = min(block_b, pl.cdiv(B, 2))
    # rows per tile must be a multiple of 8 sublanes whenever the grid has > 1 step.
    while (block_b * n_pad) % 8:
        block_b += 1

    G = pl.cdiv(B, block_b)
    B_pad = G * block_b
    if B_pad != B:  # zero-pad extra samples; their (finite) weights are discarded.
        x = jnp.pad(x, ((0, B_pad - B), (0, 0), (0, 0)))

    rows = block_b * n_pad
    x_flat = x.reshape(B_pad * n_pad, D)          # free, sample-major rows

    kernel = functools.partial(attention_layer_kernel, group=n_pad, n_valid=N)
    out = pl.pallas_call(
        kernel,
        out_shape=jax.ShapeDtypeStruct((G, 1, rows), jnp.float32),
        grid=(G,),
        in_specs=[
            # one contiguous (Bt*N, D) slab of samples per grid step
            pl.BlockSpec((rows, D), lambda g: (g, 0)),
            # params: same block every step -> stays resident in VMEM (no re-DMA)
            pl.BlockSpec((H, D + 2), lambda g: (0, 0)),
        ],
        # lane-dense, unmasked (1, Bt*N) store per step
        out_specs=pl.BlockSpec((None, 1, rows), lambda g: (g, 0, 0)),
        compiler_params=pltpu.CompilerParams(
            dimension_semantics=("parallel",)),   # shard batch across TCs (v7x)
    )(x_flat, params)

    w = out.reshape(B_pad, n_pad)[:B, :N]         # drop batch/member padding
    return w.reshape(B, 1, N)


def attention_layer(x, w1, b1, w2, b2=None):
    """Module-equivalent forward: x (N, D) -> (1, N).

    b2 is accepted for API parity with nn.Linear(16, 1) but is a no-op after the
    view(1,-1) softmax (shift invariance), so it never reaches the kernel.
    For production single-sample use, a plain XLA fusion would be faster; this
    path exists to exercise the Pallas kernel at exact module semantics.
    """
    params = pack_params(w1, b1, w2)
    return attention_layer_batched(x[None], params)[0]        # (1, N)


def attention_layer_ref(x, w1, b1, w2, b2):
    hp = jax.lax.Precision.HIGHEST
    h = jnp.maximum(jnp.dot(x, w1, precision=hp) + b1, 0.0)
    s = jnp.dot(h, w2, precision=hp) + b2
    return jax.nn.softmax(s.reshape(1, -1), axis=1)


if __name__ == "__main__":
    key = jax.random.PRNGKey(0)
    k_x, k_w1, k_b1, k_w2, k_b2, k_xb = jax.random.split(key, 6)

    N = 8     # number of "members" / rows being attended over
    D = 32    # embedding_dim
    H = 16    # hidden size of the first Linear

    x = jax.random.normal(k_x, (N, D), dtype=jnp.float32)
    w1 = jax.random.normal(k_w1, (D, H), dtype=jnp.float32) * 0.1
    b1 = jax.random.normal(k_b1, (H,), dtype=jnp.float32) * 0.1
    w2 = jax.random.normal(k_w2, (H, 1), dtype=jnp.float32) * 0.1
    b2 = jax.random.normal(k_b2, (1,), dtype=jnp.float32) * 0.1

    # --- single-sample forward (exact module semantics) ---
    out = jax.block_until_ready(attention_layer(x, w1, b1, w2, b2))
    ref = attention_layer_ref(x, w1, b1, w2, b2)
    assert out.shape == (1, N)
    assert jnp.allclose(out, ref, atol=1e-5, rtol=1e-5), "mismatch vs reference"
    assert jnp.allclose(jnp.sum(out), 1.0, atol=1e-5)

    # --- batched forward: many independent (N, D) problems, batch-tiled grid ---
    B = 256   # -> 2 grid steps of 128 samples, 1024 MXU columns, 1024-lane stores
    xb = jax.random.normal(k_xb, (B, N, D), dtype=jnp.float32)
    params = pack_params(w1, b1, w2)          # packed once, reused (hoisted)
    out_b = jax.block_until_ready(attention_layer_batched(xb, params))  # (B, 1, N)
    ref_b = jax.vmap(lambda xi: attention_layer_ref(xi, w1, b1, w2, b2))(xb)
    assert out_b.shape == (B, 1, N)
    assert jnp.allclose(out_b, ref_b, atol=1e-5, rtol=1e-5), "batched mismatch"

    print("KERNEL_OK")
</pallas_src>

<mosaic_0001>
module attributes {stable_mosaic.version = 11 : i64} {
  func.func @attention_layer_kernel(%arg0: i32, %arg1: memref<8x32xf32, #tpu.memory_space<vmem>>, %arg2: memref<16x34xf32, #tpu.memory_space<vmem>>, %arg3: memref<1x1x8xf32, #tpu.memory_space<vmem>>) attributes {dimension_semantics = [#tpu.dimension_semantics<parallel>], iteration_bounds = array<i64: 1>, scalar_prefetch = 0 : i64, scratch_operands = 0 : i64, tpu.core_type = #tpu.core_type<tc>, window_params = [{transform_indices = @transform_0, window_bounds = array<i64: 8, 32>}, {pipeline_mode = #tpu.pipeline_mode<synchronous>, transform_indices = @transform_1, window_bounds = array<i64: 16, 34>}, {transform_indices = @transform_2, window_bounds = array<i64: 1, 1, 8>}]} {
    %c0 = arith.constant 0 : index
    %c0_0 = arith.constant 0 : index
    %0 = vector.load %arg2[%c0, %c0_0] : memref<16x34xf32, #tpu.memory_space<vmem>>, vector<16x32xf32>
    %c0_1 = arith.constant 0 : index
    %c32 = arith.constant 32 : index
    %1 = vector.load %arg2[%c0_1, %c32] : memref<16x34xf32, #tpu.memory_space<vmem>>, vector<16x1xf32>
    %c0_2 = arith.constant 0 : index
    %c33 = arith.constant 33 : index
    %2 = vector.load %arg2[%c0_2, %c33] : memref<16x34xf32, #tpu.memory_space<vmem>>, vector<16x1xf32>
    %c0_3 = arith.constant 0 : index
    %c0_4 = arith.constant 0 : index
    %3 = vector.load %arg1[%c0_3, %c0_4] : memref<8x32xf32, #tpu.memory_space<vmem>>, vector<8x32xf32>
    %cst = arith.constant dense<0.000000e+00> : vector<16x8xf32>
    %4 = tpu.matmul %0, %3, %cst {dimension_numbers = #tpu.dot_dimension_numbers<[1], [1], [0], [0], [0, 0, 1, 0], [], []>, precision = #tpu.contract_precision<fp32>} : vector<16x32xf32>, vector<8x32xf32>, vector<16x8xf32> -> vector<16x8xf32>
    %5 = vector.broadcast %1 : vector<16x1xf32> to vector<16x8xf32>
    %6 = arith.addf %4, %5 : vector<16x8xf32>
    %cst_5 = arith.constant 0.000000e+00 : f32
    %7 = vector.broadcast %cst_5 : f32 to vector<16x8xf32>
    %8 = arith.maximumf %6, %7 : vector<16x8xf32>
    %9 = vector.broadcast %2 : vector<16x1xf32> to vector<16x8xf32>
    %10 = arith.mulf %8, %9 : vector<16x8xf32>
    %cst_6 = arith.constant dense<0.000000e+00> : vector<8xf32>
    %11 = vector.multi_reduction <add>, %10, %cst_6 [0] : vector<16x8xf32> to vector<8xf32>
    %12 = vector.shape_cast %11 : vector<8xf32> to vector<1x8xf32>
    %13 = tpu.iota {dimensions = array<i32: 1>} : vector<1x8xi32>
    %14 = vector.extract_strided_slice %12 {offsets = [0, 1], sizes = [1, 7], strides = [1, 1]} : vector<1x8xf32> to vector<1x7xf32>
    %15 = vector.extract_strided_slice %12 {offsets = [0, 0], sizes = [1, 1], strides = [1, 1]} : vector<1x8xf32> to vector<1x1xf32>
    %16 = tpu.concatenate %14, %15 in 1 : vector<1x7xf32>, vector<1x1xf32> -> vector<1x8xf32>
    %17 = vector.extract_strided_slice %12 {offsets = [0, 7], sizes = [1, 1], strides = [1, 1]} : vector<1x8xf32> to vector<1x1xf32>
    %18 = vector.extract_strided_slice %12 {offsets = [0, 0], sizes = [1, 7], strides = [1, 1]} : vector<1x8xf32> to vector<1x7xf32>
    %19 = tpu.concatenate %17, %18 in 1 : vector<1x1xf32>, vector<1x7xf32> -> vector<1x8xf32>
    %c1_i32 = arith.constant 1 : i32
    %20 = vector.broadcast %c1_i32 : i32 to vector<1x8xi32>
    %21 = arith.andi %13, %20 : vector<1x8xi32>
    %c0_i32 = arith.constant 0 : i32
    %22 = vector.broadcast %c0_i32 : i32 to vector<1x8xi32>
    %23 = arith.cmpi eq, %21, %22 : vector<1x8xi32>
    %24 = arith.select %23, %16, %19 : vector<1x8xi1>, vector<1x8xf32>
    %25 = arith.maximumf %12, %24 : vector<1x8xf32>
    %26 = vector.extract_strided_slice %25 {offsets = [0, 2], sizes = [1, 6], strides = [1, 1]} : vector<1x8xf32> to vector<1x6xf32>
    %27 = vector.extract_strided_slice %25 {offsets = [0, 0], sizes = [1, 2], strides = [1, 1]} : vector<1x8xf32> to vector<1x2xf32>
    %28 = tpu.concatenate %26, %27 in 1 : vector<1x6xf32>, vector<1x2xf32> -> vector<1x8xf32>
    %29 = vector.extract_strided_slice %25 {offsets = [0, 6], sizes = [1, 2], strides = [1, 1]} : vector<1x8xf32> to vector<1x2xf32>
    %30 = vector.extract_strided_slice %25 {offsets = [0, 0], sizes = [1, 6], strides = [1, 1]} : vector<1x8xf32> to vector<1x6xf32>
    %31 = tpu.concatenate %29, %30 in 1 : vector<1x2xf32>, vector<1x6xf32> -> vector<1x8xf32>
    %c2_i32 = arith.constant 2 : i32
    %32 = vector.broadcast %c2_i32 : i32 to vector<1x8xi32>
    %33 = arith.andi %13, %32 : vector<1x8xi32>
    %c0_i32_7 = arith.constant 0 : i32
    %34 = vector.broadcast %c0_i32_7 : i32 to vector<1x8xi32>
    %35 = arith.cmpi eq, %33, %34 : vector<1x8xi32>
    %36 = arith.select %35, %28, %31 : vector<1x8xi1>, vector<1x8xf32>
    %37 = arith.maximumf %25, %36 : vector<1x8xf32>
    %38 = vector.extract_strided_slice %37 {offsets = [0, 4], sizes = [1, 4], strides = [1, 1]} : vector<1x8xf32> to vector<1x4xf32>
    %39 = vector.extract_strided_slice %37 {offsets = [0, 0], sizes = [1, 4], strides = [1, 1]} : vector<1x8xf32> to vector<1x4xf32>
    %40 = tpu.concatenate %38, %39 in 1 : vector<1x4xf32>, vector<1x4xf32> -> vector<1x8xf32>
    %41 = vector.extract_strided_slice %37 {offsets = [0, 4], sizes = [1, 4], strides = [1, 1]} : vector<1x8xf32> to vector<1x4xf32>
    %42 = vector.extract_strided_slice %37 {offsets = [0, 0], sizes = [1, 4], strides = [1, 1]} : vector<1x8xf32> to vector<1x4xf32>
    %43 = tpu.concatenate %41, %42 in 1 : vector<1x4xf32>, vector<1x4xf32> -> vector<1x8xf32>
    %c4_i32 = arith.constant 4 : i32
    %44 = vector.broadcast %c4_i32 : i32 to vector<1x8xi32>
    %45 = arith.andi %13, %44 : vector<1x8xi32>
    %c0_i32_8 = arith.constant 0 : i32
    %46 = vector.broadcast %c0_i32_8 : i32 to vector<1x8xi32>
    %47 = arith.cmpi eq, %45, %46 : vector<1x8xi32>
    %48 = arith.select %47, %40, %43 : vector<1x8xi1>, vector<1x8xf32>
    %49 = arith.maximumf %37, %48 : vector<1x8xf32>
    %50 = arith.subf %12, %49 : vector<1x8xf32>
    %51 = math.exp %50 : vector<1x8xf32>
    %52 = vector.extract_strided_slice %51 {offsets = [0, 1], sizes = [1, 7], strides = [1, 1]} : vector<1x8xf32> to vector<1x7xf32>
    %53 = vector.extract_strided_slice %51 {offsets = [0, 0], sizes = [1, 1], strides = [1, 1]} : vector<1x8xf32> to vector<1x1xf32>
    %54 = tpu.concatenate %52, %53 in 1 : vector<1x7xf32>, vector<1x1xf32> -> vector<1x8xf32>
    %55 = vector.extract_strided_slice %51 {offsets = [0, 7], sizes = [1, 1], strides = [1, 1]} : vector<1x8xf32> to vector<1x1xf32>
    %56 = vector.extract_strided_slice %51 {offsets = [0, 0], sizes = [1, 7], strides = [1, 1]} : vector<1x8xf32> to vector<1x7xf32>
    %57 = tpu.concatenate %55, %56 in 1 : vector<1x1xf32>, vector<1x7xf32> -> vector<1x8xf32>
    %c1_i32_9 = arith.constant 1 : i32
    %58 = vector.broadcast %c1_i32_9 : i32 to vector<1x8xi32>
    %59 = arith.andi %13, %58 : vector<1x8xi32>
    %c0_i32_10 = arith.constant 0 : i32
    %60 = vector.broadcast %c0_i32_10 : i32 to vector<1x8xi32>
    %61 = arith.cmpi eq, %59, %60 : vector<1x8xi32>
    %62 = arith.select %61, %54, %57 : vector<1x8xi1>, vector<1x8xf32>
    %63 = arith.addf %51, %62 : vector<1x8xf32>
    %64 = vector.extract_strided_slice %63 {offsets = [0, 2], sizes = [1, 6], strides = [1, 1]} : vector<1x8xf32> to vector<1x6xf32>
    %65 = vector.extract_strided_slice %63 {offsets = [0, 0], sizes = [1, 2], strides = [1, 1]} : vector<1x8xf32> to vector<1x2xf32>
    %66 = tpu.concatenate %64, %65 in 1 : vector<1x6xf32>, vector<1x2xf32> -> vector<1x8xf32>
    %67 = vector.extract_strided_slice %63 {offsets = [0, 6], sizes = [1, 2], strides = [1, 1]} : vector<1x8xf32> to vector<1x2xf32>
    %68 = vector.extract_strided_slice %63 {offsets = [0, 0], sizes = [1, 6], strides = [1, 1]} : vector<1x8xf32> to vector<1x6xf32>
    %69 = tpu.concatenate %67, %68 in 1 : vector<1x2xf32>, vector<1x6xf32> -> vector<1x8xf32>
    %c2_i32_11 = arith.constant 2 : i32
    %70 = vector.broadcast %c2_i32_11 : i32 to vector<1x8xi32>
    %71 = arith.andi %13, %70 : vector<1x8xi32>
    %c0_i32_12 = arith.constant 0 : i32
    %72 = vector.broadcast %c0_i32_12 : i32 to vector<1x8xi32>
    %73 = arith.cmpi eq, %71, %72 : vector<1x8xi32>
    %74 = arith.select %73, %66, %69 : vector<1x8xi1>, vector<1x8xf32>
    %75 = arith.addf %63, %74 : vector<1x8xf32>
    %76 = vector.extract_strided_slice %75 {offsets = [0, 4], sizes = [1, 4], strides = [1, 1]} : vector<1x8xf32> to vector<1x4xf32>
    %77 = vector.extract_strided_slice %75 {offsets = [0, 0], sizes = [1, 4], strides = [1, 1]} : vector<1x8xf32> to vector<1x4xf32>
    %78 = tpu.concatenate %76, %77 in 1 : vector<1x4xf32>, vector<1x4xf32> -> vector<1x8xf32>
    %79 = vector.extract_strided_slice %75 {offsets = [0, 4], sizes = [1, 4], strides = [1, 1]} : vector<1x8xf32> to vector<1x4xf32>
    %80 = vector.extract_strided_slice %75 {offsets = [0, 0], sizes = [1, 4], strides = [1, 1]} : vector<1x8xf32> to vector<1x4xf32>
    %81 = tpu.concatenate %79, %80 in 1 : vector<1x4xf32>, vector<1x4xf32> -> vector<1x8xf32>
    %c4_i32_13 = arith.constant 4 : i32
    %82 = vector.broadcast %c4_i32_13 : i32 to vector<1x8xi32>
    %83 = arith.andi %13, %82 : vector<1x8xi32>
    %c0_i32_14 = arith.constant 0 : i32
    %84 = vector.broadcast %c0_i32_14 : i32 to vector<1x8xi32>
    %85 = arith.cmpi eq, %83, %84 : vector<1x8xi32>
    %86 = arith.select %85, %78, %81 : vector<1x8xi1>, vector<1x8xf32>
    %87 = arith.addf %75, %86 : vector<1x8xf32>
    %88 = arith.divf %51, %87 : vector<1x8xf32>
    %c0_15 = arith.constant 0 : index
    %c0_16 = arith.constant 0 : index
    %c0_17 = arith.constant 0 : index
    %89 = vector.load %arg3[%c0_15, %c0_16, %c0_17] : memref<1x1x8xf32, #tpu.memory_space<vmem>>, vector<1x1x8xf32>
    %90 = vector.shape_cast %89 : vector<1x1x8xf32> to vector<1x8xf32>
    %91 = vector.shape_cast %88 : vector<1x8xf32> to vector<1x1x8xf32>
    tpu.vector_store %arg3[%c0_15, %c0_16, %c0_17], %91 {strides = array<i32>} : memref<1x1x8xf32, #tpu.memory_space<vmem>>, vector<1x1x8xf32>,
    return
  }
  func.func @transform_0(%arg0: i32) -> (i32, i32) {
    %c0_i32 = arith.constant 0 : i32
    %c0_i32_0 = arith.constant 0 : i32
    return %arg0, %c0_i32 : i32, i32
  }
  func.func @transform_1(%arg0: i32) -> (i32, i32) {
    %c0_i32 = arith.constant 0 : i32
    %c0_i32_0 = arith.constant 0 : i32
    %c0_i32_1 = arith.constant 0 : i32
    return %c0_i32, %c0_i32_0 : i32, i32
  }
  func.func @transform_2(%arg0: i32) -> (i32, i32, i32) {
    %c0_i32 = arith.constant 0 : i32
    %c0_i32_0 = arith.constant 0 : i32
    %c0_i32_1 = arith.constant 0 : i32
    return %arg0, %c0_i32, %c0_i32_0 : i32, i32, i32
  }
}

</mosaic_0001>

<llo_original>
// kernel: tpu_custom_call.1
$region0: #{tpu_custom_call.1}
  #allocation0 [shape = 'u32[]', space=smem, size = 0x4, offset = 0x4, fixed_abs, tag = 'smem constant byte address 0x4 - core index']
  #allocation1 [shape = 'u32[72,128]{1,0:T(1,128)}', space=vmem, size = 0x9000, scoped, tag = 'internal scratch']
  %s0 = inlined_call_operand.hbm [shape: f32[8,32], index: 0, kind: input, shape index: {}]
  %s1 = inlined_call_operand.hbm [shape: f32[16,34], index: 1, kind: input, shape index: {}]
  %s2 = inlined_call_operand.hbm [shape: f32[1,1,8], index: 2, kind: output, shape index: {}]
  %s3 = sld [smem:[#allocation0]]
  $region26: #{tpu_custom_call.1} parent=0
    _
  %s5 = ssub.s32 1, %s3
  %s6 = scalar_select 0, %s5, %s3
  $region1: #{tpu_custom_call.1} parent=0
    #allocation2 [shape = 'u8[4096]{0}', space=vmem, size = 0x1000, scoped, tag = 'input window, operand 0, single buffered']
    #allocation3 [shape = 's32[1]{0}', space=sflag, size = 0x4, scoped, tag = 'scoped memory for tpu_custom_call.1']
    #allocation4 [shape = 's32[1]{0}', space=sflag, size = 0x4, scoped, tag = 'scoped memory for tpu_custom_call.1']
    #allocation5 [shape = 'u8[8192]{0}', space=vmem, size = 0x2000, scoped, tag = 'input window, operand 1, single buffered']
    #allocation6 [shape = 's32[1]{0}', space=sflag, size = 0x4, scoped, tag = 'scoped memory for tpu_custom_call.1']
    #allocation7 [shape = 'u8[512]{0}', space=vmem, size = 0x400, scoped, tag = 'output window, operand 0, single buffered']
    %7 = vsyncpa [#allocation3], 0
    %8 = vsyncpa [#allocation6], 0
    %9 = vsyncpa [#allocation4], 0
    // Predicated region
    $region2: #{tpu_custom_call.1} parent=1 // pred_check
      _
    $region3: #{tpu_custom_call.1} parent=1 // pred_check_branch
      %11 = sbr.rel (0) target = $region5
    $region4: #{tpu_custom_call.1} parent=1 // pred_region
      %13 = vsyncadd [#allocation3], 0
      %s15 = sshll.u32 %s0, 4
      %s16 = int_to_ptr.hbm [resolvable:$true] %s15
      %s17 = sshll.u32 [#allocation2], 4
      %s18 = int_to_ptr.vmem [resolvable:$true] %s17
      %20 = dma.hbm_to_vmem [thread:$0]  %s16, 128, %s18, [#allocation3]
    $region5: #{tpu_custom_call.1} parent=1 // pred_fallthru
      _
    // Predicated region
    $region6: #{tpu_custom_call.1} parent=1 // pred_check
      _
    $region7: #{tpu_custom_call.1} parent=1 // pred_check_branch
      %22 = sbr.rel (0) target = $region9
    $region8: #{tpu_custom_call.1} parent=1 // pred_region
      %24 = vsyncadd [#allocation6], 0
      %s25 = sshll.u32 %s1, 4
      %s26 = int_to_ptr.hbm [resolvable:$true] %s25
      %s27 = sshll.u32 [#allocation5], 4
      %s28 = int_to_ptr.vmem [resolvable:$true] %s27
      %33 = dma.hbm_to_vmem [thread:$0]  %s26, 256, %s28, [#allocation6], 128, 128, 8
    $region9: #{tpu_custom_call.1} parent=1 // pred_fallthru
      _
    // Predicated region
    $region10: #{tpu_custom_call.1} parent=1 // pred_check
      _
    $region11: #{tpu_custom_call.1} parent=1 // pred_check_branch
      %35 = sbr.rel (0) target = $region13
    $region12: #{tpu_custom_call.1} parent=1 // pred_region
      %37 = dma.done [#allocation3], 128
    $region13: #{tpu_custom_call.1} parent=1 // pred_fallthru
      _
    // Predicated region
    $region14: #{tpu_custom_call.1} parent=1 // pred_check
      _
    $region15: #{tpu_custom_call.1} parent=1 // pred_check_branch
      %39 = sbr.rel (0) target = $region17
    $region16: #{tpu_custom_call.1} parent=1 // pred_region
      %41 = dma.done [#allocation6], 256
    $region17: #{tpu_custom_call.1} parent=1 // pred_fallthru
      _
    %v42 = vld [vmem:[#allocation5] sm:$0xff]
    %v43 = vld [vmem:[#allocation5 + $0x8] sm:$0xff]
    %v44 = vld [vmem:[#allocation2] sm:$0xff]
    %46 = vset.pattern.permute.xlu0 32
    %47 = vperm.xlu0 %46, %v42
    %v48 = vpop.permute.xlu0 %47
    %51 = vset.pattern.permute.xlu0 32
    %52 = vperm.xlu0 %51, %v43
    %v53 = vpop.permute.xlu0 %52
    %vm55 = vcmask 261120
    %v56 = vsel %vm55, %v42, 0
    %v58 = vsel %vm55, %v43, 0
    %v61 = vsel %vm55, %v44, 0
    %63 = vmatpush.xpose.msra.mxu0 0.0
    %64 = vmatpush.xpose.msra.mxu0 0.0
    %65 = vmatpush.xpose.msra.mxu0 0.0
    %66 = vmatpush.xpose.msra.mxu0 0.0
    %67 = vmatpush.xpose.msra.mxu0 0.0
    %68 = vmatpush.xpose.msra.mxu0 0.0
    %69 = vmatpush.xpose.msra.mxu0 0.0
    %70 = vmatpush.xpose.msra.mxu0 0.0
    %71 = vmatpush.xpose.msra.mxu0 0.0
    %72 = vmatpush.xpose.msra.mxu0 0.0
    %73 = vmatpush.xpose.msra.mxu0 0.0
    %74 = vmatpush.xpose.msra.mxu0 0.0
    %75 = vmatpush.xpose.msra.mxu0 0.0
    %76 = vmatpush.xpose.msra.mxu0 0.0
    %77 = vmatpush.xpose.msra.mxu0 0.0
    %v78 = vand.u32 %v61, 4294901760
    %79 = vmatpush.xpose.msra.mxu0 %v78
    %v80 = vand.u32 %v56, 4294901760
    %v81 = vsub.f32 %v56, %v80
    %v82 = vand.u32 %v81, 4294901760
    %v83 = vsub.f32 %v81, %v82
    %v84 = vand.u32 %v83, 4294901760
    %85 = vmatmul.f32.gmra.mxu0 %v84
    %v86 = vpop.f32.mrf.mxu0
    %v87 = vadd.f32 %v48, %v86
    %v88 = vand.u32 %v58, 4294901760
    %v89 = vsub.f32 %v58, %v88
    %v90 = vand.u32 %v89, 4294901760
    %v91 = vsub.f32 %v89, %v90
    %v92 = vand.u32 %v91, 4294901760
    %93 = vmatmul.f32.gmra.mxu0 %v92
    %v94 = vpop.f32.mrf.mxu0
    %v95 = vadd.f32 %v53, %v94
    %96 = vdwg.mxu0
    %97 = vmatpush.xpose.msra.mxu0 0.0
    %98 = vmatpush.xpose.msra.mxu0 0.0
    %99 = vmatpush.xpose.msra.mxu0 0.0
    %100 = vmatpush.xpose.msra.mxu0 0.0
    %101 = vmatpush.xpose.msra.mxu0 0.0
    %102 = vmatpush.xpose.msra.mxu0 0.0
    %103 = vmatpush.xpose.msra.mxu0 0.0
    %104 = vmatpush.xpose.msra.mxu0 0.0
    %105 = vmatpush.xpose.msra.mxu0 0.0
    %106 = vmatpush.xpose.msra.mxu0 0.0
    %107 = vmatpush.xpose.msra.mxu0 0.0
    %108 = vmatpush.xpose.msra.mxu0 0.0
    %109 = vmatpush.xpose.msra.mxu0 0.0
    %110 = vmatpush.xpose.msra.mxu0 0.0
    %111 = vmatpush.xpose.msra.mxu0 0.0
    %v112 = vand.u32 %v61, 4294901760
    %v113 = vsub.f32 %v61, %v112
    %v114 = vand.u32 %v113, 4294901760
    %v115 = vsub.f32 %v113, %v114
    %v116 = vand.u32 %v115, 4294901760
    %117 = vmatpush.xpose.msra.mxu0 %v116
    %v118 = vand.u32 %v56, 4294901760
    %119 = vmatmul.f32.gmra.mxu0 %v118
    %v120 = vpop.f32.mrf.mxu0
    %v121 = vadd.f32 %v87, %v120
    %v122 = vand.u32 %v58, 4294901760
    %123 = vmatmul.f32.gmra.mxu0 %v122
    %v124 = vpop.f32.mrf.mxu0
    %v125 = vadd.f32 %v95, %v124
    %126 = vdwg.mxu0
    %127 = vmatpush.xpose.msra.mxu0 0.0
    %128 = vmatpush.xpose.msra.mxu0 0.0
    %129 = vmatpush.xpose.msra.mxu0 0.0
    %130 = vmatpush.xpose.msra.mxu0 0.0
    %131 = vmatpush.xpose.msra.mxu0 0.0
    %132 = vmatpush.xpose.msra.mxu0 0.0
    %133 = vmatpush.xpose.msra.mxu0 0.0
    %134 = vmatpush.xpose.msra.mxu0 0.0
    %135 = vmatpush.xpose.msra.mxu0 0.0
    %136 = vmatpush.xpose.msra.mxu0 0.0
    %137 = vmatpush.xpose.msra.mxu0 0.0
    %138 = vmatpush.xpose.msra.mxu0 0.0
    %139 = vmatpush.xpose.msra.mxu0 0.0
    %140 = vmatpush.xpose.msra.mxu0 0.0
    %141 = vmatpush.xpose.msra.mxu0 0.0
    %v142 = vand.u32 %v61, 4294901760
    %v143 = vsub.f32 %v61, %v142
    %144 = vmatpush.xpose.msra.mxu0 %v143
    %v145 = vand.u32 %v56, 4294901760
    %v146 = vsub.f32 %v56, %v145
    %147 = vmatmul.f32.gmra.mxu0 %v146
    %v148 = vpop.f32.mrf.mxu0
    %v149 = vadd.f32 %v121, %v148
    %v150 = vand.u32 %v58, 4294901760
    %v151 = vsub.f32 %v58, %v150
    %152 = vmatmul.f32.gmra.mxu0 %v151
    %v153 = vpop.f32.mrf.mxu0
    %v154 = vadd.f32 %v125, %v153
    %155 = vdwg.mxu0
    %156 = vmatpush.xpose.msra.mxu0 0.0
    %157 = vmatpush.xpose.msra.mxu0 0.0
    %158 = vmatpush.xpose.msra.mxu0 0.0
    %159 = vmatpush.xpose.msra.mxu0 0.0
    %160 = vmatpush.xpose.msra.mxu0 0.0
    %161 = vmatpush.xpose.msra.mxu0 0.0
    %162 = vmatpush.xpose.msra.mxu0 0.0
    %163 = vmatpush.xpose.msra.mxu0 0.0
    %164 = vmatpush.xpose.msra.mxu0 0.0
    %165 = vmatpush.xpose.msra.mxu0 0.0
    %166 = vmatpush.xpose.msra.mxu0 0.0
    %167 = vmatpush.xpose.msra.mxu0 0.0
    %168 = vmatpush.xpose.msra.mxu0 0.0
    %169 = vmatpush.xpose.msra.mxu0 0.0
    %170 = vmatpush.xpose.msra.mxu0 0.0
    %v171 = vand.u32 %v61, 4294901760
    %172 = vmatpush.xpose.msra.mxu0 %v171
    %v173 = vand.u32 %v56, 4294901760
    %v174 = vsub.f32 %v56, %v173
    %v175 = vand.u32 %v174, 4294901760
    %176 = vmatmul.f32.gmra.mxu0 %v175
    %v177 = vpop.f32.mrf.mxu0
    %v178 = vadd.f32 %v149, %v177
    %v179 = vand.u32 %v58, 4294901760
    %v180 = vsub.f32 %v58, %v179
    %v181 = vand.u32 %v180, 4294901760
    %182 = vmatmul.f32.gmra.mxu0 %v181
    %v183 = vpop.f32.mrf.mxu0
    %v184 = vadd.f32 %v154, %v183
    %185 = vdwg.mxu0
    %186 = vmatpush.xpose.msra.mxu0 0.0
    %187 = vmatpush.xpose.msra.mxu0 0.0
    %188 = vmatpush.xpose.msra.mxu0 0.0
    %189 = vmatpush.xpose.msra.mxu0 0.0
    %190 = vmatpush.xpose.msra.mxu0 0.0
    %191 = vmatpush.xpose.msra.mxu0 0.0
    %192 = vmatpush.xpose.msra.mxu0 0.0
    %193 = vmatpush.xpose.msra.mxu0 0.0
    %194 = vmatpush.xpose.msra.mxu0 0.0
    %195 = vmatpush.xpose.msra.mxu0 0.0
    %196 = vmatpush.xpose.msra.mxu0 0.0
    %197 = vmatpush.xpose.msra.mxu0 0.0
    %198 = vmatpush.xpose.msra.mxu0 0.0
    %199 = vmatpush.xpose.msra.mxu0 0.0
    %200 = vmatpush.xpose.msra.mxu0 0.0
    %v201 = vand.u32 %v61, 4294901760
    %v202 = vsub.f32 %v61, %v201
    %v203 = vand.u32 %v202, 4294901760
    %204 = vmatpush.xpose.msra.mxu0 %v203
    %v205 = vand.u32 %v56, 4294901760
    %206 = vmatmul.f32.gmra.mxu0 %v205
    %v207 = vpop.f32.mrf.mxu0
    %v208 = vadd.f32 %v178, %v207
    %v209 = vand.u32 %v58, 4294901760
    %210 = vmatmul.f32.gmra.mxu0 %v209
    %v211 = vpop.f32.mrf.mxu0
    %v212 = vadd.f32 %v184, %v211
    %213 = vdwg.mxu0
    %214 = vmatpush.xpose.msra.mxu0 0.0
    %215 = vmatpush.xpose.msra.mxu0 0.0
    %216 = vmatpush.xpose.msra.mxu0 0.0
    %217 = vmatpush.xpose.msra.mxu0 0.0
    %218 = vmatpush.xpose.msra.mxu0 0.0
    %219 = vmatpush.xpose.msra.mxu0 0.0
    %220 = vmatpush.xpose.msra.mxu0 0.0
    %221 = vmatpush.xpose.msra.mxu0 0.0
    %222 = vmatpush.xpose.msra.mxu0 0.0
    %223 = vmatpush.xpose.msra.mxu0 0.0
    %224 = vmatpush.xpose.msra.mxu0 0.0
    %225 = vmatpush.xpose.msra.mxu0 0.0
    %226 = vmatpush.xpose.msra.mxu0 0.0
    %227 = vmatpush.xpose.msra.mxu0 0.0
    %228 = vmatpush.xpose.msra.mxu0 0.0
    %v229 = vand.u32 %v61, 4294901760
    %230 = vmatpush.xpose.msra.mxu0 %v229
    %v231 = vand.u32 %v56, 4294901760
    %232 = vmatmul.f32.gmra.mxu0 %v231
    %v233 = vpop.f32.mrf.mxu0
    %v234 = vadd.f32 %v208, %v233
    %v235 = vand.u32 %v58, 4294901760
    %236 = vmatmul.f32.gmra.mxu0 %v235
    %v237 = vpop.f32.mrf.mxu0
    %v238 = vadd.f32 %v212, %v237
    %239 = vdwg.mxu0
    %v240 = vmax.f32 %v234, 0.0
    %v241 = vmax.f32 %v238, 0.0
    %242 = vset.pattern.permute.xlu0 33
    %243 = vperm.xlu0 %242, %v42
    %v244 = vpop.permute.xlu0 %243
    %246 = vset.pattern.permute.xlu0 33
    %247 = vperm.xlu0 %246, %v43
    %v248 = vpop.permute.xlu0 %247
    %v250 = vmul.f32 %v240, %v244
    %v251 = vmul.f32 %v241, %v248
    %vm252 = vcmask 64512
    %v253 = vsel %vm252, %v250, 0.0
    %v254 = vsel %vm252, %v251, 0.0
    %v255 = vadd.f32 %v253, %v254
    %v256 = vrot.slane %v255, 4
    %v257 = vadd.f32 %v255, %v256
    %v258 = vrot.slane %v257, 2
    %v259 = vadd.f32 %v257, %v258
    %v260 = vrot.slane %v259, 1
    %v261 = vadd.f32 %v259, %v260
    %v262 = vlaneseq
    %v263 = vand.u32 %v262, 127
    %265 = vrot.lane.b32.xlu0 %v261, 127
    %v266 = vpop.permute.xlu0 %265
    %268 = vrot.lane.b32.xlu0 %v261, 7
    %v269 = vpop.permute.xlu0 %268
    %vm271 = vcmask 56320
    %v272 = vsel %vm271, %v266, %v269
    %273 = vrot.lane.b32.xlu0 %v261, 121
    %v274 = vpop.permute.xlu0 %273
    %276 = vrot.lane.b32.xlu0 %v261, 1
    %v277 = vpop.permute.xlu0 %276
    %vm279 = vcmask 7168
    %v280 = vsel %vm279, %v274, %v277
    %v281 = vand.u32 %v263, 1
    %vm282 = vcmp.eq.s32.totalorder %v281, 0
    %v283 = vsel %vm282, %v272, %v280
    %v284 = vmax.f32 %v261, %v283
    %286 = vrot.lane.b32.xlu0 %v284, 126
    %v287 = vpop.permute.xlu0 %286
    %289 = vrot.lane.b32.xlu0 %v284, 6
    %v290 = vpop.permute.xlu0 %289
    %vm292 = vcmask 48128
    %v293 = vsel %vm292, %v287, %v290
    %294 = vrot.lane.b32.xlu0 %v284, 122
    %v295 = vpop.permute.xlu0 %294
    %297 = vrot.lane.b32.xlu0 %v284, 2
    %v298 = vpop.permute.xlu0 %297
    %vm300 = vcmask 15360
    %v301 = vsel %vm300, %v295, %v298
    %v302 = vand.u32 %v263, 2
    %vm303 = vcmp.eq.s32.totalorder %v302, 0
    %v304 = vsel %vm303, %v293, %v301
    %v305 = vmax.f32 %v284, %v304
    %307 = vrot.lane.b32.xlu0 %v305, 124
    %v308 = vpop.permute.xlu0 %307
    %310 = vrot.lane.b32.xlu0 %v305, 4
    %v311 = vpop.permute.xlu0 %310
    %vm313 = vcmask 31744
    %v314 = vsel %vm313, %v308, %v311
    %v315 = vmax.f32 %v305, %v314
    %v316 = vsub.f32 %v261, %v315
    %v317 = vmul.f32 %v316, 1.442695
    %v318 = vpow.pop %v317
    %320 = vrot.lane.b32.xlu0 %v318, 127
    %v321 = vpop.permute.xlu0 %320
    %323 = vrot.lane.b32.xlu0 %v318, 7
    %v324 = vpop.permute.xlu0 %323
    %v326 = vsel %vm271, %v321, %v324
    %327 = vrot.lane.b32.xlu0 %v318, 121
    %v328 = vpop.permute.xlu0 %327
    %330 = vrot.lane.b32.xlu0 %v318, 1
    %v331 = vpop.permute.xlu0 %330
    %v333 = vsel %vm279, %v328, %v331
    %v334 = vsel %vm282, %v326, %v333
    %v335 = vadd.f32 %v318, %v334
    %337 = vrot.lane.b32.xlu0 %v335, 126
    %v338 = vpop.permute.xlu0 %337
    %340 = vrot.lane.b32.xlu0 %v335, 6
    %v341 = vpop.permute.xlu0 %340
    %v343 = vsel %vm292, %v338, %v341
    %344 = vrot.lane.b32.xlu0 %v335, 122
    %v345 = vpop.permute.xlu0 %344
    %347 = vrot.lane.b32.xlu0 %v335, 2
    %v348 = vpop.permute.xlu0 %347
    %v350 = vsel %vm300, %v345, %v348
    %v351 = vsel %vm303, %v343, %v350
    %v352 = vadd.f32 %v335, %v351
    %354 = vrot.lane.b32.xlu0 %v352, 124
    %v355 = vpop.permute.xlu0 %354
    %357 = vrot.lane.b32.xlu0 %v352, 4
    %v358 = vpop.permute.xlu0 %357
    %v360 = vsel %vm313, %v355, %v358
    %v361 = vadd.f32 %v352, %v360
    %v362 = vrcp.pop %v361
    %v363 = vmul.f32 %v361, %v362
    %v364 = vsub.f32 1.0, %v363
    %v365 = vmul.f32 %v362, %v364
    %v366 = vadd.f32 %v362, %v365
    %vm367 = vweird.f32 %v361
    %vm368 = vweird.f32 %v362
    %vm369 = vmor %vm367, %vm368
    %v370 = vsel %vm369, %v362, %v366
    %v371 = vand.u32 2147483647, %v361
    %vm372 = vcmp.eq.f32.partialorder %v371, 8.507059e+37
    %v373 = vand.u32 %v361, 2147483648
    %v374 = vor.u32 1.1754944e-38, %v373
    %v375 = vsel %vm372, %v374, %v370
    %v376 = vmul.f32 %v318, %v375
    %vm377 = vcmask 57344
    %378 = vst.msk [vmem:[#allocation7] sm:$0x1] %vm377, %v376
    // Predicated region
    $region18: #{tpu_custom_call.1} parent=1 // pred_check
      _
    $region19: #{tpu_custom_call.1} parent=1 // pred_check_branch
      %380 = sbr.rel (0) target = $region21
    $region20: #{tpu_custom_call.1} parent=1 // pred_region
      %382 = vsyncadd [#allocation4], 0
      %s384 = sshll.u32 [#allocation7], 4
      %s385 = int_to_ptr.vmem [resolvable:$true] %s384
      %s386 = sshll.u32 %s2, 4
      %s387 = int_to_ptr.hbm [resolvable:$true] %s386
      %389 = dma.vmem_to_hbm [thread:$0]  %s385, 16, %s387, [#allocation4]
    $region21: #{tpu_custom_call.1} parent=1 // pred_fallthru
      _
    // Predicated region
    $region22: #{tpu_custom_call.1} parent=1 // pred_check
      _
    $region23: #{tpu_custom_call.1} parent=1 // pred_check_branch
      %391 = sbr.rel (0) target = $region25
    $region24: #{tpu_custom_call.1} parent=1 // pred_region
      %393 = dma.done [#allocation4], 16
    $region25: #{tpu_custom_call.1} parent=1 // pred_fallthru
      _
    %394 = vsyncpa [#allocation3], 1
    %395 = vsyncpa [#allocation6], 1
    %396 = vsyncpa [#allocation4], 1

</llo_original>
